<compile_context>
chip_gen: v5e
topology: v5e:2x2
jax: 0.10.0
libtpu: 0.0.40
codegen_flags: <defaults>
</compile_context>

<pallas_src>
import functools

import jax
import jax.numpy as jnp
import numpy as np
from jax import lax
from jax.experimental import pallas as pl
from jax.experimental.pallas import tpu as pltpu


_VMEM_LIMIT = 48 * 1024 * 1024  # stays under v7x's 64 MiB physical VMEM


# --------------------------------------------------------------------------
# Kernel A: per-row-tile feature transform   XW = X @ W
# --------------------------------------------------------------------------
def _feature_transform_kernel(x_ref, w_ref, out_ref):
    out_ref[...] = jnp.dot(
        x_ref[...], w_ref[...], preferred_element_type=jnp.float32
    ).astype(out_ref.dtype)


def _feature_transform(x, w, *, tile_m, out_dtype):
    n, d = x.shape
    h = w.shape[1]
    return pl.pallas_call(
        _feature_transform_kernel,
        out_shape=jax.ShapeDtypeStruct((n, h), out_dtype),
        grid_spec=pltpu.PrefetchScalarGridSpec(
            num_scalar_prefetch=0,
            grid=(n // tile_m,),
            in_specs=[
                pl.BlockSpec((tile_m, d), lambda i: (i, 0)),   # X row tile
                pl.BlockSpec((d, h), lambda i: (0, 0)),        # W resident
            ],
            out_specs=pl.BlockSpec((tile_m, h), lambda i: (i, 0)),
        ),
        compiler_params=pltpu.CompilerParams(
            dimension_semantics=("parallel",),
            vmem_limit_bytes=_VMEM_LIMIT,
        ),
    )(x, w)


# --------------------------------------------------------------------------
# Kernel B: fused layer-1 aggregation + ReLU + layer-2 feature transform
#   HW1[i-tile] = relu( sum_k adj[i-tile, k-tile] @ XW0[k-tile] ) @ W1
# --------------------------------------------------------------------------
def _agg_relu_project_kernel(adj_ref, feat_ref, w_ref, out_ref, acc_ref):
    k = pl.program_id(1)

    @pl.when(k == 0)
    def _():
        acc_ref[...] = jnp.zeros_like(acc_ref)

    acc_ref[...] += jnp.dot(
        adj_ref[...], feat_ref[...], preferred_element_type=jnp.float32
    )

    @pl.when(k == pl.num_programs(1) - 1)
    def _():
        hidden = jnp.maximum(acc_ref[...], 0.0).astype(w_ref.dtype)  # f32 relu
        out_ref[...] = jnp.dot(
            hidden, w_ref[...], preferred_element_type=jnp.float32
        ).astype(out_ref.dtype)


def _agg_relu_project(adj, feat, w, *, tile_m, tile_k, out_dtype):
    n = adj.shape[0]
    h_in = feat.shape[1]
    h_out = w.shape[1]
    return pl.pallas_call(
        _agg_relu_project_kernel,
        out_shape=jax.ShapeDtypeStruct((n, h_out), out_dtype),
        grid_spec=pltpu.PrefetchScalarGridSpec(
            num_scalar_prefetch=0,
            grid=(n // tile_m, n // tile_k),
            in_specs=[
                pl.BlockSpec((tile_m, tile_k), lambda i, k: (i, k)),  # adj tile
                pl.BlockSpec((tile_k, h_in), lambda i, k: (k, 0)),    # XW0 k-slab
                pl.BlockSpec((h_in, h_out), lambda i, k: (0, 0)),     # W1 resident
            ],
            out_specs=pl.BlockSpec((tile_m, h_out), lambda i, k: (i, 0)),
            scratch_shapes=[pltpu.VMEM((tile_m, h_in), jnp.float32)],
        ),
        compiler_params=pltpu.CompilerParams(
            dimension_semantics=("parallel", "arbitrary"),
            vmem_limit_bytes=_VMEM_LIMIT,
        ),
    )(adj, feat, w)


# --------------------------------------------------------------------------
# Kernel C: layer-2 aggregation   Z[i-tile] = sum_k adj[i-tile, k-tile] @ HW1[k-tile]
# --------------------------------------------------------------------------
def _aggregate_kernel(adj_ref, feat_ref, out_ref, acc_ref):
    k = pl.program_id(1)

    @pl.when(k == 0)
    def _():
        acc_ref[...] = jnp.zeros_like(acc_ref)

    acc_ref[...] += jnp.dot(
        adj_ref[...], feat_ref[...], preferred_element_type=jnp.float32
    )

    @pl.when(k == pl.num_programs(1) - 1)
    def _():
        out_ref[...] = acc_ref[...].astype(out_ref.dtype)


def _aggregate(adj, feat, *, tile_m, tile_k, out_dtype):
    n = adj.shape[0]
    h = feat.shape[1]
    return pl.pallas_call(
        _aggregate_kernel,
        out_shape=jax.ShapeDtypeStruct((n, h), out_dtype),
        grid_spec=pltpu.PrefetchScalarGridSpec(
            num_scalar_prefetch=0,
            grid=(n // tile_m, n // tile_k),
            in_specs=[
                pl.BlockSpec((tile_m, tile_k), lambda i, k: (i, k)),  # adj tile
                pl.BlockSpec((tile_k, h), lambda i, k: (k, 0)),       # HW1 k-slab
            ],
            out_specs=pl.BlockSpec((tile_m, h), lambda i, k: (i, 0)),
            scratch_shapes=[pltpu.VMEM((tile_m, h), jnp.float32)],
        ),
        compiler_params=pltpu.CompilerParams(
            dimension_semantics=("parallel", "arbitrary"),
            vmem_limit_bytes=_VMEM_LIMIT,
        ),
    )(adj, feat)


# --------------------------------------------------------------------------
# Kernel D: dot-product decoder   A_pred[i-tile, j-tile] = sigmoid(Z_i @ Z_j^T)
# --------------------------------------------------------------------------
def _decoder_kernel(zi_ref, zj_ref, out_ref):
    # Contract on the last dim of both operands: no explicit transpose of Z.
    logits = lax.dot_general(
        zi_ref[...], zj_ref[...],
        dimension_numbers=(((1,), (1,)), ((), ())),
        preferred_element_type=jnp.float32,
    )
    # sigmoid(x) = 1 / (1 + exp(-x)); exp and approx reciprocal run on the EUP
    # slot, keeping the N^2 epilogue off the VALU slots.
    out_ref[...] = pl.reciprocal(1.0 + jnp.exp(-logits), approx=True)


def _dot_product_decode(z, *, tile_m):
    n, h = z.shape
    # TODO(synk): A_pred is symmetric; computing only j >= i tiles and manually
    # DMA-ing the transposed tile to (j, i) would halve decoder work.
    return pl.pallas_call(
        _decoder_kernel,
        out_shape=jax.ShapeDtypeStruct((n, n), jnp.float32),
        grid_spec=pltpu.PrefetchScalarGridSpec(
            num_scalar_prefetch=0,
            grid=(n // tile_m, n // tile_m),
            in_specs=[
                pl.BlockSpec((tile_m, h), lambda i, j: (i, 0)),  # Z "row" tile
                pl.BlockSpec((tile_m, h), lambda i, j: (j, 0)),  # Z "col" tile
            ],
            out_specs=pl.BlockSpec((tile_m, tile_m), lambda i, j: (i, j)),
        ),
        compiler_params=pltpu.CompilerParams(
            dimension_semantics=("parallel", "parallel"),
            vmem_limit_bytes=_VMEM_LIMIT,
        ),
    )(z, z)


# --------------------------------------------------------------------------
# Full forward pass
# --------------------------------------------------------------------------
def gae_forward(x, adj, w0, w1, *, compute_dtype=jnp.bfloat16,
                tile_m=None, tile_k=None):
    """GAE forward pass. Returns A_pred (float32, shape [N, N])."""
    n = adj.shape[0]
    if tile_m is None:
        tile_m = 256 if n % 256 == 0 else 128
    if tile_k is None:
        tile_k = tile_m
    assert n % tile_m == 0 and n % tile_k == 0, (n, tile_m, tile_k)
    assert tile_m % 128 == 0 and tile_k % 128 == 0, (tile_m, tile_k)

    adj_c = adj.astype(compute_dtype)
    x_c = x.astype(compute_dtype)
    w0_c = w0.astype(compute_dtype)
    w1_c = w1.astype(compute_dtype)

    # XW0 = X @ W0                         (tiny, row-tiled, computed once)
    xw0 = _feature_transform(x_c, w0_c, tile_m=tile_m, out_dtype=compute_dtype)
    # HW1 = relu(adj @ XW0) @ W1           (fused; 'hidden' never hits HBM)
    hw1 = _agg_relu_project(adj_c, xw0, w1_c, tile_m=tile_m, tile_k=tile_k,
                            out_dtype=compute_dtype)
    # Z = adj @ HW1
    z = _aggregate(adj_c, hw1, tile_m=tile_m, tile_k=tile_k,
                   out_dtype=compute_dtype)
    # A_pred = sigmoid(Z @ Z.T)
    return _dot_product_decode(z, tile_m=tile_m)


def glorot_init(key, input_dim, output_dim):
    # mirrors glorot_init in the PyTorch module: U(-r, r), r = sqrt(6/(in+out))
    init_range = np.sqrt(6.0 / (input_dim + output_dim))
    return jax.random.uniform(
        key, (input_dim, output_dim), dtype=jnp.float32,
        minval=-init_range, maxval=init_range)


if __name__ == "__main__":
    # Small shapes consistent with the module:
    #   N nodes = 128, input_dim = 64, hidden1_dim = 32, hidden2_dim = 16
    N, INPUT_DIM, HIDDEN1, HIDDEN2 = 128, 64, 32, 16

    key = jax.random.PRNGKey(0)
    k_x, k_adj, k_w0, k_w1 = jax.random.split(key, 4)

    # Node features.
    x = jax.random.normal(k_x, (N, INPUT_DIM), dtype=jnp.float32)

    # Symmetric, row-normalized dense adjacency with self-loops (dense stand-in
    # for the sparse adj fed into GraphConvSparse).
    a_raw = (jax.random.uniform(k_adj, (N, N)) < 0.05).astype(jnp.float32)
    a_sym = jnp.maximum(a_raw, a_raw.T) + jnp.eye(N, dtype=jnp.float32)
    deg = jnp.sum(a_sym, axis=1, keepdims=True)
    adj = a_sym / deg

    # Deterministic glorot-style parameters.
    w0 = glorot_init(k_w0, INPUT_DIM, HIDDEN1)
    w1 = glorot_init(k_w1, HIDDEN1, HIDDEN2)

    # Fast path (bf16 MXU operands, f32 accumulation) and strict f32 path.
    a_pred = gae_forward(x, adj, w0, w1)                              # bf16
    a_pred_f32 = gae_forward(x, adj, w0, w1, compute_dtype=jnp.float32)
    jax.block_until_ready((a_pred, a_pred_f32))

    # Reference in plain JAX (same math as the PyTorch module).
    hidden_ref = jax.nn.relu(adj @ (x @ w0))
    z_ref = adj @ (hidden_ref @ w1)
    a_ref = jax.nn.sigmoid(z_ref @ z_ref.T)

    # Tight structural check on the f32 path (tolerance covers the EUP
    # approximate-reciprocal in the sigmoid epilogue).
    np.testing.assert_allclose(np.asarray(a_pred_f32), np.asarray(a_ref),
                               rtol=2e-3, atol=2e-3)
    # Loose check on the bf16 fast path (bf16 operand rounding on the matmuls).
    np.testing.assert_allclose(np.asarray(a_pred), np.asarray(a_ref),
                               rtol=0.0, atol=5e-2)

    print("KERNEL_OK")
</pallas_src>

<mosaic_0001>
module attributes {stable_mosaic.version = 11 : i64} {
  func.func @_feature_transform_kernel(%arg0: i32, %arg1: memref<128x64xbf16, #tpu.memory_space<vmem>>, %arg2: memref<64x32xbf16, #tpu.memory_space<vmem>>, %arg3: memref<128x32xbf16, #tpu.memory_space<vmem>>) attributes {dimension_semantics = [#tpu.dimension_semantics<parallel>], iteration_bounds = array<i64: 1>, scalar_prefetch = 0 : i64, scratch_operands = 0 : i64, tpu.core_type = #tpu.core_type<tc>, window_params = [{transform_indices = @transform_0, window_bounds = array<i64: 128, 64>}, {pipeline_mode = #tpu.pipeline_mode<synchronous>, transform_indices = @transform_1, window_bounds = array<i64: 64, 32>}, {transform_indices = @transform_2, window_bounds = array<i64: 128, 32>}]} {
    %c0 = arith.constant 0 : index
    %c0_0 = arith.constant 0 : index
    %0 = vector.load %arg1[%c0, %c0_0] : memref<128x64xbf16, #tpu.memory_space<vmem>>, vector<128x64xbf16>
    %c0_1 = arith.constant 0 : index
    %c0_2 = arith.constant 0 : index
    %1 = vector.load %arg2[%c0_1, %c0_2] : memref<64x32xbf16, #tpu.memory_space<vmem>>, vector<64x32xbf16>
    %cst = arith.constant dense<0.000000e+00> : vector<128x32xf32>
    %2 = tpu.matmul %0, %1, %cst {dimension_numbers = #tpu.dot_dimension_numbers<[1], [0], [0], [1], [0, 0, 1, 1], [], []>} : vector<128x64xbf16>, vector<64x32xbf16>, vector<128x32xf32> -> vector<128x32xf32>
    %3 = arith.truncf %2 : vector<128x32xf32> to vector<128x32xbf16>
    %c0_3 = arith.constant 0 : index
    %c0_4 = arith.constant 0 : index
    %4 = vector.load %arg3[%c0_3, %c0_4] : memref<128x32xbf16, #tpu.memory_space<vmem>>, vector<128x32xbf16>
    tpu.vector_store %arg3[%c0_3, %c0_4], %3 {strides = array<i32>} : memref<128x32xbf16, #tpu.memory_space<vmem>>, vector<128x32xbf16>,
    return
  }
  func.func @transform_0(%arg0: i32) -> (i32, i32) {
    %c0_i32 = arith.constant 0 : i32
    %c0_i32_0 = arith.constant 0 : i32
    return %arg0, %c0_i32 : i32, i32
  }
  func.func @transform_1(%arg0: i32) -> (i32, i32) {
    %c0_i32 = arith.constant 0 : i32
    %c0_i32_0 = arith.constant 0 : i32
    %c0_i32_1 = arith.constant 0 : i32
    return %c0_i32, %c0_i32_0 : i32, i32
  }
  func.func @transform_2(%arg0: i32) -> (i32, i32) {
    %c0_i32 = arith.constant 0 : i32
    %c0_i32_0 = arith.constant 0 : i32
    return %arg0, %c0_i32 : i32, i32
  }
}

</mosaic_0001>

<llo_original>
// kernel: tpu_custom_call.1
$region0: #{tpu_custom_call.1}
  #allocation0 [shape = 'u32[]', space=smem, size = 0x4, offset = 0x4, fixed_abs, tag = 'smem constant byte address 0x4 - core index']
  #allocation1 [shape = 'u32[72,128]{1,0:T(1,128)}', space=vmem, size = 0x9000, scoped, tag = 'internal scratch']
  %s0 = inlined_call_operand.vmem [shape: bf16[128,64], index: 0, kind: input, shape index: {}]
  %s1 = inlined_call_operand.vmem [shape: bf16[64,32], index: 1, kind: input, shape index: {}]
  %s2 = inlined_call_operand.vmem [shape: bf16[128,32], index: 2, kind: output, shape index: {}]
  %s3 = sld [smem:[#allocation0]]
  $region18: #{tpu_custom_call.1} parent=0
    _
  %s5 = ssub.s32 1, %s3
  %s6 = scalar_select 0, %s5, %s3
  // Predicated region
  $region2: #{tpu_custom_call.1} parent=0 // pred_check
    _
  $region3: #{tpu_custom_call.1} parent=0 // pred_check_branch
    %8 = sbr.rel (0) target = $region5
  $region4: #{tpu_custom_call.1} parent=0 // pred_region
    _
  $region5: #{tpu_custom_call.1} parent=0 // pred_fallthru
    _
  // Predicated region
  $region6: #{tpu_custom_call.1} parent=0 // pred_check
    _
  $region7: #{tpu_custom_call.1} parent=0 // pred_check_branch
    %10 = sbr.rel (0) target = $region9
  $region8: #{tpu_custom_call.1} parent=0 // pred_region
    _
  $region9: #{tpu_custom_call.1} parent=0 // pred_fallthru
    _
  %v12 = vld [vmem:[%s0] sm:$0xf]
  %v13 = vld [vmem:[%s0 + $0x4] sm:$0xf]
  %v14 = vld [vmem:[%s0 + $0x8] sm:$0xf]
  %v15 = vld [vmem:[%s0 + $0xc] sm:$0xf]
  %v16 = vld [vmem:[%s0 + $0x10] sm:$0xf]
  %v17 = vld [vmem:[%s0 + $0x14] sm:$0xf]
  %v18 = vld [vmem:[%s0 + $0x18] sm:$0xf]
  %v19 = vld [vmem:[%s0 + $0x1c] sm:$0xf]
  %v20 = vld [vmem:[%s0 + $0x20] sm:$0xf]
  %v21 = vld [vmem:[%s0 + $0x24] sm:$0xf]
  %v22 = vld [vmem:[%s0 + $0x28] sm:$0xf]
  %v23 = vld [vmem:[%s0 + $0x2c] sm:$0xf]
  %v24 = vld [vmem:[%s0 + $0x30] sm:$0xf]
  %v25 = vld [vmem:[%s0 + $0x34] sm:$0xf]
  %v26 = vld [vmem:[%s0 + $0x38] sm:$0xf]
  %v27 = vld [vmem:[%s0 + $0x3c] sm:$0xf]
  %v28 = vld [vmem:[%s1] sm:$0xf]
  %v29 = vld [vmem:[%s1 + $0x4] sm:$0xf]
  %v30 = vld [vmem:[%s1 + $0x8] sm:$0xf]
  %v31 = vld [vmem:[%s1 + $0xc] sm:$0xf]
  %v32 = vld [vmem:[%s1 + $0x10] sm:$0xf]
  %v33 = vld [vmem:[%s1 + $0x14] sm:$0xf]
  %v34 = vld [vmem:[%s1 + $0x18] sm:$0xf]
  %v35 = vld [vmem:[%s1 + $0x1c] sm:$0xf]
  %v52 = vunpack.c.l.b16 %v12
  %v53 = vunpack.c.l.b16 %v13
  %v54 = vunpack.c.l.b16 %v14
  %v55 = vunpack.c.l.b16 %v15
  %v56 = vunpack.c.l.b16 %v16
  %v57 = vunpack.c.l.b16 %v17
  %v58 = vunpack.c.l.b16 %v18
  %v59 = vunpack.c.l.b16 %v19
  %v60 = vunpack.c.l.b16 %v20
  %v61 = vunpack.c.l.b16 %v21
  %v62 = vunpack.c.l.b16 %v22
  %v63 = vunpack.c.l.b16 %v23
  %v64 = vunpack.c.l.b16 %v24
  %v65 = vunpack.c.l.b16 %v25
  %v66 = vunpack.c.l.b16 %v26
  %v67 = vunpack.c.l.b16 %v27
  %v68 = vpack.c.b16 %v53, %v52
  %v69 = vpack.c.b16 %v55, %v54
  %v70 = vpack.c.b16 %v57, %v56
  %v71 = vpack.c.b16 %v59, %v58
  %v72 = vpack.c.b16 %v61, %v60
  %v73 = vpack.c.b16 %v63, %v62
  %v74 = vpack.c.b16 %v65, %v64
  %v75 = vpack.c.b16 %v67, %v66
  %v84 = vunpack.c.l.b16 %v28
  %v85 = vunpack.c.l.b16 %v29
  %v86 = vunpack.c.l.b16 %v30
  %v87 = vunpack.c.l.b16 %v31
  %v88 = vunpack.c.l.b16 %v32
  %v89 = vunpack.c.l.b16 %v33
  %v90 = vunpack.c.l.b16 %v34
  %v91 = vunpack.c.l.b16 %v35
  %v92 = vpack.c.b16 %v85, %v84
  %v93 = vpack.c.b16 %v87, %v86
  %v94 = vpack.c.b16 %v89, %v88
  %v95 = vpack.c.b16 %v91, %v90
  %vm100 = vcmask 523264
  %v102 = vsel %vm100, %v68, 0
  %v105 = vsel %vm100, %v69, 0
  %v108 = vsel %vm100, %v70, 0
  %v111 = vsel %vm100, %v71, 0
  %v114 = vsel %vm100, %v72, 0
  %v117 = vsel %vm100, %v73, 0
  %v120 = vsel %vm100, %v74, 0
  %v123 = vsel %vm100, %v75, 0
  %125 = vmatpush.bf16.msra.mxu0 0
  %126 = vmatpush.bf16.msra.mxu0 0
  %127 = vmatpush.bf16.msra.mxu0 0
  %128 = vmatpush.bf16.msra.mxu0 0
  %129 = vmatpush.bf16.msra.mxu0 %v95
  %130 = vmatpush.bf16.msra.mxu0 %v94
  %131 = vmatpush.bf16.msra.mxu0 %v93
  %132 = vmatpush.bf16.msra.mxu0 %v92
  %133 = vmatmul.bf16.gmra.mxu0 %v102
  %v134 = vpop.f32.mrf.mxu0
  %v135 = vadd.f32 0.0, %v134
  %v136 = vpop.f32.mrf.mxu0
  %v137 = vadd.f32 0.0, %v136
  %138 = vmatmul.bf16.gmra.mxu0 %v105
  %v139 = vpop.f32.mrf.mxu0
  %v140 = vadd.f32 0.0, %v139
  %v141 = vpop.f32.mrf.mxu0
  %v142 = vadd.f32 0.0, %v141
  %143 = vmatmul.bf16.gmra.mxu0 %v108
  %v144 = vpop.f32.mrf.mxu0
  %v145 = vadd.f32 0.0, %v144
  %v146 = vpop.f32.mrf.mxu0
  %v147 = vadd.f32 0.0, %v146
  %148 = vmatmul.bf16.gmra.mxu0 %v111
  %v149 = vpop.f32.mrf.mxu0
  %v150 = vadd.f32 0.0, %v149
  %v151 = vpop.f32.mrf.mxu0
  %v152 = vadd.f32 0.0, %v151
  %153 = vmatmul.bf16.gmra.mxu0 %v114
  %v154 = vpop.f32.mrf.mxu0
  %v155 = vadd.f32 0.0, %v154
  %v156 = vpop.f32.mrf.mxu0
  %v157 = vadd.f32 0.0, %v156
  %158 = vmatmul.bf16.gmra.mxu0 %v117
  %v159 = vpop.f32.mrf.mxu0
  %v160 = vadd.f32 0.0, %v159
  %v161 = vpop.f32.mrf.mxu0
  %v162 = vadd.f32 0.0, %v161
  %163 = vmatmul.bf16.gmra.mxu0 %v120
  %v164 = vpop.f32.mrf.mxu0
  %v165 = vadd.f32 0.0, %v164
  %v166 = vpop.f32.mrf.mxu0
  %v167 = vadd.f32 0.0, %v166
  %168 = vmatmul.bf16.gmra.mxu0 %v123
  %v169 = vpop.f32.mrf.mxu0
  %v170 = vadd.f32 0.0, %v169
  %v171 = vpop.f32.mrf.mxu0
  %v172 = vadd.f32 0.0, %v171
  %173 = vdwg.mxu0
  %v174 = vpack.c.bf16 %v135, %v135
  %v175 = vpack.c.bf16 %v137, %v137
  %v176 = vpack.c.bf16 %v140, %v140
  %v177 = vpack.c.bf16 %v142, %v142
  %v178 = vpack.c.bf16 %v145, %v145
  %v179 = vpack.c.bf16 %v147, %v147
  %v180 = vpack.c.bf16 %v150, %v150
  %v181 = vpack.c.bf16 %v152, %v152
  %v182 = vpack.c.bf16 %v155, %v155
  %v183 = vpack.c.bf16 %v157, %v157
  %v184 = vpack.c.bf16 %v160, %v160
  %v185 = vpack.c.bf16 %v162, %v162
  %v186 = vpack.c.bf16 %v165, %v165
  %v187 = vpack.c.bf16 %v167, %v167
  %v188 = vpack.c.bf16 %v170, %v170
  %v189 = vpack.c.bf16 %v172, %v172
  %vm190 = vcmask 257024
  %191 = vst.msk [vmem:[%s2] sm:$0xf] %vm190, %v174
  %192 = vst.msk [vmem:[%s2 + $0x4] sm:$0xf] %vm190, %v175
  %193 = vst.msk [vmem:[%s2 + $0x8] sm:$0xf] %vm190, %v176
  %194 = vst.msk [vmem:[%s2 + $0xc] sm:$0xf] %vm190, %v177
  %195 = vst.msk [vmem:[%s2 + $0x10] sm:$0xf] %vm190, %v178
  %196 = vst.msk [vmem:[%s2 + $0x14] sm:$0xf] %vm190, %v179
  %197 = vst.msk [vmem:[%s2 + $0x18] sm:$0xf] %vm190, %v180
  %198 = vst.msk [vmem:[%s2 + $0x1c] sm:$0xf] %vm190, %v181
  %199 = vst.msk [vmem:[%s2 + $0x20] sm:$0xf] %vm190, %v182
  %200 = vst.msk [vmem:[%s2 + $0x24] sm:$0xf] %vm190, %v183
  %201 = vst.msk [vmem:[%s2 + $0x28] sm:$0xf] %vm190, %v184
  %202 = vst.msk [vmem:[%s2 + $0x2c] sm:$0xf] %vm190, %v185
  %203 = vst.msk [vmem:[%s2 + $0x30] sm:$0xf] %vm190, %v186
  %204 = vst.msk [vmem:[%s2 + $0x34] sm:$0xf] %vm190, %v187
  %205 = vst.msk [vmem:[%s2 + $0x38] sm:$0xf] %vm190, %v188
  %206 = vst.msk [vmem:[%s2 + $0x3c] sm:$0xf] %vm190, %v189
  // Predicated region
  $region10: #{tpu_custom_call.1} parent=0 // pred_check
    _
  $region11: #{tpu_custom_call.1} parent=0 // pred_check_branch
    %208 = sbr.rel (0) target = $region13
  $region12: #{tpu_custom_call.1} parent=0 // pred_region
    _
  $region13: #{tpu_custom_call.1} parent=0 // pred_fallthru
    _
  // Predicated region
  $region14: #{tpu_custom_call.1} parent=0 // pred_check
    _
  $region15: #{tpu_custom_call.1} parent=0 // pred_check_branch
    %210 = sbr.rel (0) target = $region17
  $region16: #{tpu_custom_call.1} parent=0 // pred_region
    _
  $region17: #{tpu_custom_call.1} parent=0 // pred_fallthru
    _

</llo_original>
